<compile_context>
chip_gen: v7x
topology: tpu7x:2x2x1
jax: 0.10.0
libtpu: 0.0.40
codegen_flags: <defaults>
</compile_context>

<pallas_src>
import functools

import jax
import jax.numpy as jnp
from jax import lax
from jax.experimental import pallas as pl
from jax.experimental.pallas import tpu as pltpu


def _round_up(x, m):
    return ((x + m - 1) // m) * m


def _log_sigmoid(x):
    # numerically stable logsigmoid(x) = min(x, 0) - log1p(exp(-|x|))
    return jnp.minimum(x, 0.0) - jnp.log1p(jnp.exp(-jnp.abs(x)))


def _vmem_capacity_bytes():
    try:
        return int(pltpu.get_tpu_info().vmem_capacity_bytes)
    except Exception:
        return 64 * 1024 * 1024  # v7x-conservative fallback


def _tile_partial_loss(vt_buf, cand_buf, base, tile_b, num_neg, batch):
    """Shared compute: per-tile partial loss (1,1) from gathered rows."""
    kp1 = num_neg + 1
    d = vt_buf.shape[-1]
    v_t = vt_buf[...].astype(jnp.float32)                          # (tile_b, D)
    cand = cand_buf[...].astype(jnp.float32).reshape(tile_b, kp1, d)
    scores = jnp.sum(cand * v_t[:, None, :], axis=-1)              # (tile_b, K+1)
    # Candidate 0 is the context (+1 sign), candidates 1..K are negatives (-1).
    sign = jnp.where(
        lax.broadcasted_iota(jnp.int32, (1, kp1), 1) == 0, 1.0, -1.0)
    # TODO(synk): a lane-dense (K+1, tile_b) layout for the logsigmoid pass
    # would use vregs better, but needs a relayout transpose and compute is
    # not the bottleneck here.
    ls = _log_sigmoid(scores * sign)                               # (tile_b, K+1)
    # Mask rows that are only batch padding so they don't pollute the mean.
    rows = base + lax.broadcasted_iota(jnp.int32, (tile_b, 1), 0)
    ls = jnp.where(rows < batch, ls, 0.0)
    per_row = jnp.sum(ls, axis=-1, keepdims=True)                  # (tile_b, 1)
    return jnp.sum(per_row, axis=0, keepdims=True)                 # (1, 1)


def _write_tile_partial(out_ref, partial):
    # One (8, 128) lane-dense block per tile: partial sum in [0, 0], zeros
    # elsewhere (unmasked vst; ~16x less HBM writeback than per-row blocks).
    r_i = lax.broadcasted_iota(jnp.int32, (8, 128), 0)
    l_i = lax.broadcasted_iota(jnp.int32, (8, 128), 1)
    out_ref[...] = jnp.where((r_i == 0) & (l_i == 0), partial, 0.0)


def _make_dma_kernel(tile_b, num_neg, batch):
    """HBM tables: per-row DMA gather + aggregated byte-counted drains."""
    kp1 = num_neg + 1

    def kernel(tgt_ref, ctx_ref, neg_ref,       # scalar-prefetch indices (SMEM)
               in_emb_hbm, out_emb_hbm,         # embedding tables (HBM / ANY)
               out_ref,                         # (8, 128) per-tile partial loss
               vt_buf, cand_buf, sem):          # VMEM scratch + DMA semaphores
        i = pl.program_id(0)
        base = i * tile_b

        # Fused gather: one row DMA per needed embedding row.  The inner K loop
        # is statically unrolled so the scalar core can pack index loads and
        # descriptor setup; padded rows still fetch row 0 (masked in compute).
        @pl.loop(0, tile_b)
        def _gather_row(r):
            g = base + r
            pltpu.make_async_copy(
                in_emb_hbm.at[pl.ds(tgt_ref[g], 1)],
                vt_buf.at[pl.ds(r, 1)], sem.at[0]).start()
            rr = r * kp1
            pltpu.make_async_copy(
                out_emb_hbm.at[pl.ds(ctx_ref[g], 1)],
                cand_buf.at[pl.ds(rr, 1)], sem.at[1]).start()
            gk = g * num_neg
            for k in range(num_neg):            # static unroll (K is small)
                pltpu.make_async_copy(
                    out_emb_hbm.at[pl.ds(neg_ref[gk + k], 1)],
                    cand_buf.at[pl.ds(rr + 1 + k, 1)], sem.at[1]).start()

        # Aggregated drain: DMA semaphores count bytes, so a single wait per
        # buffer whose descriptor byte count equals the sum of the issued row
        # copies drains them all (per-buffer semaphores keep the accounting
        # exact even if the two tables use different dtypes).
        pltpu.make_async_copy(vt_buf, vt_buf, sem.at[0]).wait()
        pltpu.make_async_copy(cand_buf, cand_buf, sem.at[1]).wait()

        partial = _tile_partial_loss(vt_buf, cand_buf, base, tile_b, num_neg,
                                     batch)
        _write_tile_partial(out_ref, partial)

    return kernel


def _make_resident_kernel(tile_b, num_neg, batch):
    """VMEM-resident tables: gather rows with on-chip dynamic loads."""
    kp1 = num_neg + 1

    def kernel(tgt_ref, ctx_ref, neg_ref,       # scalar-prefetch indices (SMEM)
               in_tab_ref, out_tab_ref,         # full tables, resident in VMEM
               out_ref,                         # (8, 128) per-tile partial loss
               vt_buf, cand_buf):               # gather staging (VMEM)
        i = pl.program_id(0)
        base = i * tile_b

        @pl.loop(0, tile_b)
        def _gather_row(r):
            g = base + r
            vt_buf[pl.ds(r, 1), :] = in_tab_ref[pl.ds(tgt_ref[g], 1), :]
            rr = r * kp1
            cand_buf[pl.ds(rr, 1), :] = out_tab_ref[pl.ds(ctx_ref[g], 1), :]
            gk = g * num_neg
            for k in range(num_neg):            # static unroll (K is small)
                cand_buf[pl.ds(rr + 1 + k, 1), :] = (
                    out_tab_ref[pl.ds(neg_ref[gk + k], 1), :])

        partial = _tile_partial_loss(vt_buf, cand_buf, base, tile_b, num_neg,
                                     batch)
        _write_tile_partial(out_ref, partial)

    return kernel


@functools.partial(jax.jit, static_argnames=("tile_b", "residency"))
def sgns_forward(in_emb, out_emb, targets, contexts, negatives, *,
                 tile_b=None, residency="auto"):
    """Fused SGNS forward: in-kernel embedding gather + loss.

    residency: "auto" | "vmem" | "hbm".  "vmem" keeps both embedding tables
    resident in VMEM (on-chip gather); "hbm" leaves them in HBM (per-row DMA
    gather).  "auto" picks based on the VMEM budget of the current chip.
    """
    v_in, d = in_emb.shape
    v_out, d_out = out_emb.shape
    assert d == d_out, "in/out embedding dims must match"
    b = targets.shape[0]
    k_neg = negatives.shape[1]
    kp1 = k_neg + 1

    cap = _vmem_capacity_bytes()

    # Tile size: multiple of 8 (sublanes), large enough to amortize the
    # ~0.35 us per-grid-step cost, and >=2 tiles when possible so the
    # "parallel" grid axis can shard across both TensorCores on v7x.
    if tile_b is None:
        tile_b = min(256, _round_up(max((b + 1) // 2, 8), 8))
    tile_b = max(8, _round_up(tile_b, 8))

    def scratch_bytes(tb):
        return (tb * d * in_emb.dtype.itemsize
                + tb * kp1 * d * out_emb.dtype.itemsize)

    table_bytes = (v_in * d * in_emb.dtype.itemsize
                   + v_out * d * out_emb.dtype.itemsize)
    # Resident fast-path budget: ~45% of physical VMEM (64 MiB on v7x,
    # 128 MiB on v5e/v6e), counting double-buffered BlockSpec copies.
    resident_budget = int(cap * 0.45)
    if residency == "auto":
        fits = (2 * table_bytes + scratch_bytes(tile_b) + (2 << 20)
                <= resident_budget)
        residency = "vmem" if fits else "hbm"

    scratch_budget = (max(2 << 20, resident_budget - 2 * table_bytes)
                      if residency == "vmem" else 16 << 20)
    while tile_b > 8 and scratch_bytes(tile_b) > scratch_budget:
        tile_b = max(8, _round_up(tile_b // 2, 8))

    b_pad = _round_up(b, tile_b)
    num_tiles = b_pad // tile_b
    pad = b_pad - b

    # Pad index arrays to a tile multiple (index 0 is always a valid table row;
    # padded rows are masked in-kernel so the mean stays exact).  Negatives are
    # flattened to 1-D so SMEM is not padded out to a 128-wide trailing dim.
    tgt = jnp.pad(targets.astype(jnp.int32), (0, pad))
    ctx = jnp.pad(contexts.astype(jnp.int32), (0, pad))
    neg = jnp.pad(negatives.astype(jnp.int32), ((0, pad), (0, 0))).reshape(-1)

    out_shape = jax.ShapeDtypeStruct((num_tiles * 8, 128), jnp.float32)
    out_spec = pl.BlockSpec((8, 128), lambda i, *_: (i, 0))
    gather_scratch = [
        pltpu.VMEM((tile_b, d), in_emb.dtype),            # v_t rows
        pltpu.VMEM((tile_b * kp1, d), out_emb.dtype),     # [v_c, v_n...] rows
    ]

    if residency == "vmem":
        kernel = _make_resident_kernel(tile_b, k_neg, b)
        in_specs = [
            pl.BlockSpec((v_in, d), lambda i, *_: (0, 0)),   # resident in VMEM
            pl.BlockSpec((v_out, d), lambda i, *_: (0, 0)),  # (constant index)
        ]
        scratch_shapes = gather_scratch
        vmem_limit = min(int(cap * 0.85),
                         2 * table_bytes + scratch_bytes(tile_b) + (16 << 20))
        vmem_limit = max(vmem_limit, 32 << 20)
    else:
        kernel = _make_dma_kernel(tile_b, k_neg, b)
        in_specs = [
            pl.BlockSpec(memory_space=pl.ANY),   # in_emb  stays in HBM
            pl.BlockSpec(memory_space=pl.ANY),   # out_emb stays in HBM
        ]
        scratch_shapes = gather_scratch + [pltpu.SemaphoreType.DMA((2,))]
        vmem_limit = 32 << 20

    grid_spec = pltpu.PrefetchScalarGridSpec(
        num_scalar_prefetch=3,
        grid=(num_tiles,),
        in_specs=in_specs,
        out_specs=out_spec,
        scratch_shapes=scratch_shapes,
    )

    per_tile = pl.pallas_call(
        kernel,
        grid_spec=grid_spec,
        out_shape=out_shape,
        compiler_params=pltpu.CompilerParams(
            # Every tile is self-contained (issues and drains its own gather),
            # so the grid axis shards across both v7x TensorCores; neutral on
            # single-TC v5e/v6e.
            dimension_semantics=("parallel",),
            vmem_limit_bytes=vmem_limit,
        ),
    )(tgt, ctx, neg, in_emb, out_emb)

    # Only [8*t, 0] of each tile block is non-zero; padded rows were masked.
    return -jnp.sum(per_tile) / b


def _reference_forward(in_emb, out_emb, targets, contexts, negatives):
    v_t = in_emb[targets]
    v_c = out_emb[contexts]
    loss_pos = jax.nn.log_sigmoid(jnp.sum(v_t * v_c, axis=1))
    v_n = out_emb[negatives]
    score_neg = jnp.einsum("bkd,bd->bk", -v_n, v_t)
    loss_neg = jnp.sum(jax.nn.log_sigmoid(score_neg), axis=1)
    return -jnp.mean(loss_pos + loss_neg)


if __name__ == "__main__":
    num_nodes = 50
    emb_dim = 32
    batch = 10      # deliberately not a tile multiple -> exercises row masking
    num_neg = 7     # K + 1 = 8 candidate rows per target (sublane aligned)

    key = jax.random.PRNGKey(0)
    k_in, k_pert, k_t, k_c, k_n = jax.random.split(key, 5)

    # Parameter init matching the PyTorch module __init__ (in_emb uniform,
    # out_emb zero) plus a small perturbation so scores are non-trivial.
    in_emb = jax.random.uniform(
        k_in, (num_nodes, emb_dim), dtype=jnp.float32,
        minval=-0.5 / emb_dim, maxval=0.5 / emb_dim)
    out_emb = jnp.zeros((num_nodes, emb_dim), jnp.float32) + 0.1 * jax.random.normal(
        k_pert, (num_nodes, emb_dim), dtype=jnp.float32)

    targets = jax.random.randint(k_t, (batch,), 0, num_nodes, dtype=jnp.int32)
    contexts = jax.random.randint(k_c, (batch,), 0, num_nodes, dtype=jnp.int32)
    negatives = jax.random.randint(
        k_n, (batch, num_neg), 0, num_nodes, dtype=jnp.int32)

    ref = jax.block_until_ready(
        _reference_forward(in_emb, out_emb, targets, contexts, negatives))

    # Resident-table fast path (tables fit comfortably in VMEM here).
    loss_vmem = jax.block_until_ready(
        sgns_forward(in_emb, out_emb, targets, contexts, negatives,
                     residency="vmem"))
    assert jnp.allclose(loss_vmem, ref, rtol=1e-5, atol=1e-5), (loss_vmem, ref)

    # HBM + per-row-DMA gather path (what large vocabularies fall back to).
    loss_hbm = jax.block_until_ready(
        sgns_forward(in_emb, out_emb, targets, contexts, negatives,
                     residency="hbm"))
    assert jnp.allclose(loss_hbm, ref, rtol=1e-5, atol=1e-5), (loss_hbm, ref)

    # Auto dispatch (picks the resident path at these sizes).
    loss_auto = jax.block_until_ready(
        sgns_forward(in_emb, out_emb, targets, contexts, negatives))
    assert jnp.allclose(loss_auto, ref, rtol=1e-5, atol=1e-5), (loss_auto, ref)

    print("KERNEL_OK")
</pallas_src>

<mosaic_0001>
module attributes {stable_mosaic.version = 11 : i64} {
  func.func @kernel(%arg0: i32, %arg1: memref<16xi32, #tpu.memory_space<smem>>, %arg2: memref<16xi32, #tpu.memory_space<smem>>, %arg3: memref<112xi32, #tpu.memory_space<smem>>, %arg4: memref<50x32xf32, #tpu.memory_space<vmem>>, %arg5: memref<50x32xf32, #tpu.memory_space<vmem>>, %arg6: memref<8x128xf32, #tpu.memory_space<vmem>>, %arg7: memref<8x32xf32, #tpu.memory_space<vmem>>, %arg8: memref<64x32xf32, #tpu.memory_space<vmem>>) attributes {dimension_semantics = [#tpu.dimension_semantics<parallel>], iteration_bounds = array<i64: 2>, scalar_prefetch = 3 : i64, scratch_operands = 2 : i64, tpu.core_type = #tpu.core_type<tc>, window_params = [{pipeline_mode = #tpu.pipeline_mode<synchronous>, transform_indices = @transform_0, window_bounds = array<i64: 50, 32>}, {pipeline_mode = #tpu.pipeline_mode<synchronous>, transform_indices = @transform_1, window_bounds = array<i64: 50, 32>}, {transform_indices = @transform_2, window_bounds = array<i64: 8, 128>}]} {
    %c8_i32 = arith.constant 8 : i32
    %0 = arith.muli %arg0, %c8_i32 : i32
    %c0_i32 = arith.constant 0 : i32
    %c8_i32_0 = arith.constant 8 : i32
    %1 = arith.addi %c0_i32, %c8_i32_0 : i32
    %c1_i32 = arith.constant 1 : i32
    scf.for %arg9 = %c0_i32 to %1 step %c1_i32  : i32 {
      %c1_i32_18 = arith.constant 1 : i32
      %50 = arith.muli %arg9, %c1_i32_18 : i32
      %c0_i32_19 = arith.constant 0 : i32
      %51 = arith.addi %c0_i32_19, %50 : i32
      %52 = arith.addi %0, %51 : i32
      %53 = arith.index_cast %52 : i32 to index
      %54 = memref.load %arg1[%53] : memref<16xi32, #tpu.memory_space<smem>>
      %55 = arith.index_cast %54 : i32 to index
      %c0_20 = arith.constant 0 : index
      %56 = vector.load %arg4[%55, %c0_20] : memref<50x32xf32, #tpu.memory_space<vmem>>, vector<1x32xf32>
      %57 = arith.index_cast %51 : i32 to index
      %c0_21 = arith.constant 0 : index
      %58 = vector.load %arg7[%57, %c0_21] : memref<8x32xf32, #tpu.memory_space<vmem>>, vector<1x32xf32>
      tpu.vector_store %arg7[%57, %c0_21], %56 {strides = array<i32>} : memref<8x32xf32, #tpu.memory_space<vmem>>, vector<1x32xf32>,
      %c8_i32_22 = arith.constant 8 : i32
      %59 = arith.muli %51, %c8_i32_22 : i32
      %60 = arith.index_cast %52 : i32 to index
      %61 = memref.load %arg2[%60] : memref<16xi32, #tpu.memory_space<smem>>
      %62 = arith.index_cast %61 : i32 to index
      %c0_23 = arith.constant 0 : index
      %63 = vector.load %arg5[%62, %c0_23] : memref<50x32xf32, #tpu.memory_space<vmem>>, vector<1x32xf32>
      %64 = arith.index_cast %59 : i32 to index
      %c0_24 = arith.constant 0 : index
      %65 = vector.load %arg8[%64, %c0_24] : memref<64x32xf32, #tpu.memory_space<vmem>>, vector<1x32xf32>
      tpu.vector_store %arg8[%64, %c0_24], %63 {strides = array<i32>} : memref<64x32xf32, #tpu.memory_space<vmem>>, vector<1x32xf32>,
      %c7_i32 = arith.constant 7 : i32
      %66 = arith.muli %52, %c7_i32 : i32
      %c0_i32_25 = arith.constant 0 : i32
      %67 = arith.addi %66, %c0_i32_25 : i32
      %68 = arith.index_cast %67 : i32 to index
      %69 = memref.load %arg3[%68] : memref<112xi32, #tpu.memory_space<smem>>
      %70 = arith.index_cast %69 : i32 to index
      %c0_26 = arith.constant 0 : index
      %71 = vector.load %arg5[%70, %c0_26] : memref<50x32xf32, #tpu.memory_space<vmem>>, vector<1x32xf32>
      %c1_i32_27 = arith.constant 1 : i32
      %72 = arith.addi %59, %c1_i32_27 : i32
      %c0_i32_28 = arith.constant 0 : i32
      %73 = arith.addi %72, %c0_i32_28 : i32
      %74 = arith.index_cast %73 : i32 to index
      %c0_29 = arith.constant 0 : index
      %75 = vector.load %arg8[%74, %c0_29] : memref<64x32xf32, #tpu.memory_space<vmem>>, vector<1x32xf32>
      tpu.vector_store %arg8[%74, %c0_29], %71 {strides = array<i32>} : memref<64x32xf32, #tpu.memory_space<vmem>>, vector<1x32xf32>,
      %c1_i32_30 = arith.constant 1 : i32
      %76 = arith.addi %66, %c1_i32_30 : i32
      %77 = arith.index_cast %76 : i32 to index
      %78 = memref.load %arg3[%77] : memref<112xi32, #tpu.memory_space<smem>>
      %79 = arith.index_cast %78 : i32 to index
      %c0_31 = arith.constant 0 : index
      %80 = vector.load %arg5[%79, %c0_31] : memref<50x32xf32, #tpu.memory_space<vmem>>, vector<1x32xf32>
      %c1_i32_32 = arith.constant 1 : i32
      %81 = arith.addi %59, %c1_i32_32 : i32
      %c1_i32_33 = arith.constant 1 : i32
      %82 = arith.addi %81, %c1_i32_33 : i32
      %83 = arith.index_cast %82 : i32 to index
      %c0_34 = arith.constant 0 : index
      %84 = vector.load %arg8[%83, %c0_34] : memref<64x32xf32, #tpu.memory_space<vmem>>, vector<1x32xf32>
      tpu.vector_store %arg8[%83, %c0_34], %80 {strides = array<i32>} : memref<64x32xf32, #tpu.memory_space<vmem>>, vector<1x32xf32>,
      %c2_i32 = arith.constant 2 : i32
      %85 = arith.addi %66, %c2_i32 : i32
      %86 = arith.index_cast %85 : i32 to index
      %87 = memref.load %arg3[%86] : memref<112xi32, #tpu.memory_space<smem>>
      %88 = arith.index_cast %87 : i32 to index
      %c0_35 = arith.constant 0 : index
      %89 = vector.load %arg5[%88, %c0_35] : memref<50x32xf32, #tpu.memory_space<vmem>>, vector<1x32xf32>
      %c1_i32_36 = arith.constant 1 : i32
      %90 = arith.addi %59, %c1_i32_36 : i32
      %c2_i32_37 = arith.constant 2 : i32
      %91 = arith.addi %90, %c2_i32_37 : i32
      %92 = arith.index_cast %91 : i32 to index
      %c0_38 = arith.constant 0 : index
      %93 = vector.load %arg8[%92, %c0_38] : memref<64x32xf32, #tpu.memory_space<vmem>>, vector<1x32xf32>
      tpu.vector_store %arg8[%92, %c0_38], %89 {strides = array<i32>} : memref<64x32xf32, #tpu.memory_space<vmem>>, vector<1x32xf32>,
      %c3_i32 = arith.constant 3 : i32
      %94 = arith.addi %66, %c3_i32 : i32
      %95 = arith.index_cast %94 : i32 to index
      %96 = memref.load %arg3[%95] : memref<112xi32, #tpu.memory_space<smem>>
      %97 = arith.index_cast %96 : i32 to index
      %c0_39 = arith.constant 0 : index
      %98 = vector.load %arg5[%97, %c0_39] : memref<50x32xf32, #tpu.memory_space<vmem>>, vector<1x32xf32>
      %c1_i32_40 = arith.constant 1 : i32
      %99 = arith.addi %59, %c1_i32_40 : i32
      %c3_i32_41 = arith.constant 3 : i32
      %100 = arith.addi %99, %c3_i32_41 : i32
      %101 = arith.index_cast %100 : i32 to index
      %c0_42 = arith.constant 0 : index
      %102 = vector.load %arg8[%101, %c0_42] : memref<64x32xf32, #tpu.memory_space<vmem>>, vector<1x32xf32>
      tpu.vector_store %arg8[%101, %c0_42], %98 {strides = array<i32>} : memref<64x32xf32, #tpu.memory_space<vmem>>, vector<1x32xf32>,
      %c4_i32 = arith.constant 4 : i32
      %103 = arith.addi %66, %c4_i32 : i32
      %104 = arith.index_cast %103 : i32 to index
      %105 = memref.load %arg3[%104] : memref<112xi32, #tpu.memory_space<smem>>
      %106 = arith.index_cast %105 : i32 to index
      %c0_43 = arith.constant 0 : index
      %107 = vector.load %arg5[%106, %c0_43] : memref<50x32xf32, #tpu.memory_space<vmem>>, vector<1x32xf32>
      %c1_i32_44 = arith.constant 1 : i32
      %108 = arith.addi %59, %c1_i32_44 : i32
      %c4_i32_45 = arith.constant 4 : i32
      %109 = arith.addi %108, %c4_i32_45 : i32
      %110 = arith.index_cast %109 : i32 to index
      %c0_46 = arith.constant 0 : index
      %111 = vector.load %arg8[%110, %c0_46] : memref<64x32xf32, #tpu.memory_space<vmem>>, vector<1x32xf32>
      tpu.vector_store %arg8[%110, %c0_46], %107 {strides = array<i32>} : memref<64x32xf32, #tpu.memory_space<vmem>>, vector<1x32xf32>,
      %c5_i32 = arith.constant 5 : i32
      %112 = arith.addi %66, %c5_i32 : i32
      %113 = arith.index_cast %112 : i32 to index
      %114 = memref.load %arg3[%113] : memref<112xi32, #tpu.memory_space<smem>>
      %115 = arith.index_cast %114 : i32 to index
      %c0_47 = arith.constant 0 : index
      %116 = vector.load %arg5[%115, %c0_47] : memref<50x32xf32, #tpu.memory_space<vmem>>, vector<1x32xf32>
      %c1_i32_48 = arith.constant 1 : i32
      %117 = arith.addi %59, %c1_i32_48 : i32
      %c5_i32_49 = arith.constant 5 : i32
      %118 = arith.addi %117, %c5_i32_49 : i32
      %119 = arith.index_cast %118 : i32 to index
      %c0_50 = arith.constant 0 : index
      %120 = vector.load %arg8[%119, %c0_50] : memref<64x32xf32, #tpu.memory_space<vmem>>, vector<1x32xf32>
      tpu.vector_store %arg8[%119, %c0_50], %116 {strides = array<i32>} : memref<64x32xf32, #tpu.memory_space<vmem>>, vector<1x32xf32>,
      %c6_i32 = arith.constant 6 : i32
      %121 = arith.addi %66, %c6_i32 : i32
      %122 = arith.index_cast %121 : i32 to index
      %123 = memref.load %arg3[%122] : memref<112xi32, #tpu.memory_space<smem>>
      %124 = arith.index_cast %123 : i32 to index
      %c0_51 = arith.constant 0 : index
      %125 = vector.load %arg5[%124, %c0_51] : memref<50x32xf32, #tpu.memory_space<vmem>>, vector<1x32xf32>
      %c1_i32_52 = arith.constant 1 : i32
      %126 = arith.addi %59, %c1_i32_52 : i32
      %c6_i32_53 = arith.constant 6 : i32
      %127 = arith.addi %126, %c6_i32_53 : i32
      %128 = arith.index_cast %127 : i32 to index
      %c0_54 = arith.constant 0 : index
      %129 = vector.load %arg8[%128, %c0_54] : memref<64x32xf32, #tpu.memory_space<vmem>>, vector<1x32xf32>
      tpu.vector_store %arg8[%128, %c0_54], %125 {strides = array<i32>} : memref<64x32xf32, #tpu.memory_space<vmem>>, vector<1x32xf32>,
    }
    %c8_i32_1 = arith.constant 8 : i32
    %c0 = arith.constant 0 : index
    %c0_2 = arith.constant 0 : index
    %2 = vector.load %arg7[%c0, %c0_2] : memref<8x32xf32, #tpu.memory_space<vmem>>, vector<8x32xf32>
    %c0_3 = arith.constant 0 : index
    %c0_4 = arith.constant 0 : index
    %3 = vector.load %arg8[%c0_3, %c0_4] : memref<64x32xf32, #tpu.memory_space<vmem>>, vector<64x32xf32>
    %4 = vector.shape_cast %3 : vector<64x32xf32> to vector<8x8x32xf32>
    %5 = vector.shape_cast %2 : vector<8x32xf32> to vector<8x1x32xf32>
    %6 = vector.broadcast %5 : vector<8x1x32xf32> to vector<8x8x32xf32>
    %7 = arith.mulf %4, %6 : vector<8x8x32xf32>
    %cst = arith.constant dense<0.000000e+00> : vector<8x8xf32>
    %8 = vector.multi_reduction <add>, %7, %cst [2] : vector<8x8x32xf32> to vector<8x8xf32>
    %9 = tpu.iota {dimensions = array<i32: 1>} : vector<1x8xi32>
    %c0_i32_5 = arith.constant 0 : i32
    %10 = vector.broadcast %c0_i32_5 : i32 to vector<1x8xi32>
    %11 = arith.cmpi eq, %9, %10 : vector<1x8xi32>
    %cst_6 = arith.constant 1.000000e+00 : f32
    %cst_7 = arith.constant -1.000000e+00 : f32
    %12 = vector.broadcast %cst_6 : f32 to vector<1x8xf32>
    %13 = vector.broadcast %cst_7 : f32 to vector<1x8xf32>
    %14 = arith.select %11, %12, %13 : vector<1x8xi1>, vector<1x8xf32>
    %15 = vector.broadcast %14 : vector<1x8xf32> to vector<8x8xf32>
    %16 = arith.mulf %8, %15 : vector<8x8xf32>
    %cst_8 = arith.constant 0.000000e+00 : f32
    %17 = vector.broadcast %cst_8 : f32 to vector<8x8xf32>
    %18 = arith.minimumf %16, %17 : vector<8x8xf32>
    %19 = math.absf %16 : vector<8x8xf32>
    %cst_9 = arith.constant 0.000000e+00 : f32
    %20 = vector.broadcast %cst_9 : f32 to vector<8x8xf32>
    %21 = arith.subf %20, %19 : vector<8x8xf32>
    %22 = math.exp %21 : vector<8x8xf32>
    %23 = math.log1p %22 : vector<8x8xf32>
    %24 = arith.subf %18, %23 : vector<8x8xf32>
    %25 = tpu.iota {dimensions = array<i32: 0>} : vector<8x1xi32>
    %26 = vector.broadcast %0 : i32 to vector<8x1xi32>
    %27 = arith.addi %26, %25 : vector<8x1xi32>
    %c10_i32 = arith.constant 10 : i32
    %28 = vector.broadcast %c10_i32 : i32 to vector<8x1xi32>
    %29 = arith.cmpi slt, %27, %28 : vector<8x1xi32>
    %cst_10 = arith.constant 0.000000e+00 : f32
    %30 = vector.shape_cast %29 : vector<8x1xi1> to vector<8x1xi1>
    %31 = vector.broadcast %30 : vector<8x1xi1> to vector<8x8xi1>
    %32 = vector.broadcast %cst_10 : f32 to vector<8x8xf32>
    %33 = arith.select %31, %24, %32 : vector<8x8xi1>, vector<8x8xf32>
    %cst_11 = arith.constant dense<0.000000e+00> : vector<8xf32>
    %34 = vector.multi_reduction <add>, %33, %cst_11 [1] : vector<8x8xf32> to vector<8xf32>
    %35 = vector.shape_cast %34 : vector<8xf32> to vector<8x1xf32>
    %cst_12 = arith.constant dense<0.000000e+00> : vector<1xf32>
    %36 = vector.multi_reduction <add>, %35, %cst_12 [0] : vector<8x1xf32> to vector<1xf32>
    %37 = vector.shape_cast %36 : vector<1xf32> to vector<1x1xf32>
    %38 = tpu.iota {dimensions = array<i32: 0>} : vector<8x128xi32>
    %39 = tpu.iota {dimensions = array<i32: 1>} : vector<8x128xi32>
    %c0_i32_13 = arith.constant 0 : i32
    %40 = vector.broadcast %c0_i32_13 : i32 to vector<8x128xi32>
    %41 = arith.cmpi eq, %38, %40 : vector<8x128xi32>
    %c0_i32_14 = arith.constant 0 : i32
    %42 = vector.broadcast %c0_i32_14 : i32 to vector<8x128xi32>
    %43 = arith.cmpi eq, %39, %42 : vector<8x128xi32>
    %44 = arith.andi %41, %43 : vector<8x128xi1>
    %cst_15 = arith.constant 0.000000e+00 : f32
    %45 = vector.shape_cast %37 : vector<1x1xf32> to vector<1x1xf32>
    %46 = vector.broadcast %45 : vector<1x1xf32> to vector<8x128xf32>
    %47 = vector.broadcast %cst_15 : f32 to vector<8x128xf32>
    %48 = arith.select %44, %46, %47 : vector<8x128xi1>, vector<8x128xf32>
    %c0_16 = arith.constant 0 : index
    %c0_17 = arith.constant 0 : index
    %49 = vector.load %arg6[%c0_16, %c0_17] : memref<8x128xf32, #tpu.memory_space<vmem>>, vector<8x128xf32>
    tpu.vector_store %arg6[%c0_16, %c0_17], %48 {strides = array<i32>} : memref<8x128xf32, #tpu.memory_space<vmem>>, vector<8x128xf32>,
    return
  }
  func.func @transform_0(%arg0: i32, %arg1: memref<16xi32, #tpu.memory_space<smem>>, %arg2: memref<16xi32, #tpu.memory_space<smem>>, %arg3: memref<112xi32, #tpu.memory_space<smem>>) -> (i32, i32) {
    %c0_i32 = arith.constant 0 : i32
    %c0_i32_0 = arith.constant 0 : i32
    %c0_i32_1 = arith.constant 0 : i32
    return %c0_i32, %c0_i32_0 : i32, i32
  }
  func.func @transform_1(%arg0: i32, %arg1: memref<16xi32, #tpu.memory_space<smem>>, %arg2: memref<16xi32, #tpu.memory_space<smem>>, %arg3: memref<112xi32, #tpu.memory_space<smem>>) -> (i32, i32) {
    %c0_i32 = arith.constant 0 : i32
    %c0_i32_0 = arith.constant 0 : i32
    %c0_i32_1 = arith.constant 0 : i32
    return %c0_i32, %c0_i32_0 : i32, i32
  }
  func.func @transform_2(%arg0: i32, %arg1: memref<16xi32, #tpu.memory_space<smem>>, %arg2: memref<16xi32, #tpu.memory_space<smem>>, %arg3: memref<112xi32, #tpu.memory_space<smem>>) -> (i32, i32) {
    %c0_i32 = arith.constant 0 : i32
    %c0_i32_0 = arith.constant 0 : i32
    return %arg0, %c0_i32 : i32, i32
  }
}

</mosaic_0001>

<llo_original>
// kernel: sgns_forward.1
$region0: #{sgns_forward.1}
  #allocation0 [shape = 'u32[]', space=smem, size = 0x4, offset = 0x4, fixed_abs, tag = 'smem constant byte address 0x4 - core index']
  #allocation1 [shape = 'u32[144,128]{1,0:T(1,128)}', space=vmem, size = 0x12000, scoped, tag = 'internal scratch']
  #allocation2 [shape = 'f32[8,32]{1,0:T(8,128)}', space=vmem, size = 0x1000, scoped, tag = 'scratch operand']
  #allocation3 [shape = 'f32[64,32]{1,0:T(8,128)}', space=vmem, size = 0x8000, scoped, tag = 'scratch operand']
  #allocation4 [shape = 's32[1]{0}', space=sflag, size = 0x4, scoped, tag = 'scoped memory for sgns_forward.1']
  #allocation5 [shape = 'u8[512]{0}', space=smem, size = 0x200, scoped, tag = 'prefetched SMEM operand 0']
  #allocation6 [shape = 'u8[512]{0}', space=smem, size = 0x200, scoped, tag = 'prefetched SMEM operand 1']
  #allocation7 [shape = 'u8[512]{0}', space=smem, size = 0x200, scoped, tag = 'prefetched SMEM operand 2']
  %s0 = inlined_call_operand.vmem [shape: s32[16], index: 0, kind: input, shape index: {}]
  %s1 = inlined_call_operand.vmem [shape: s32[16], index: 1, kind: input, shape index: {}]
  %s2 = inlined_call_operand.vmem [shape: s32[112], index: 2, kind: input, shape index: {}]
  %s3 = inlined_call_operand.vmem [shape: f32[50,32], index: 3, kind: input, shape index: {}]
  %s4 = inlined_call_operand.vmem [shape: f32[50,32], index: 4, kind: input, shape index: {}]
  %s5 = inlined_call_operand.vmem [shape: f32[16,128], index: 5, kind: output, shape index: {}]
  %s6 = sld [smem:[#allocation0]]
  $region48: #{sgns_forward.1} parent=0
    _
  %s8 = ssub.s32 1, %s6
  %s9 = scalar_select 0, %s8, %s6
  %s10 = sshll.u32 %s0, 4
  %s11 = int_to_ptr.vmem [resolvable:$true] %s10
  %13 = dma.vmem_to_smem %s11, 16, [#allocation5], [#allocation4]
  %s14 = sshll.u32 %s1, 4
  %s15 = int_to_ptr.vmem [resolvable:$true] %s14
  %17 = dma.vmem_to_smem %s15, 16, [#allocation6], [#allocation4]
  %s18 = sshll.u32 %s2, 4
  %s19 = int_to_ptr.vmem [resolvable:$true] %s18
  %21 = dma.vmem_to_smem %s19, 16, [#allocation7], [#allocation4]
  %22 = dma.done [#allocation4], 48
  %23 = sfence
  loop: start=0, step=1, limit=4
  $region2: #{sgns_forward.1} parent=0 // loop_pre_header
    _
  $region3: #{sgns_forward.1} parent=0 // loop_header
    %s25 = sphi 0, %s29
    %p26 = scmp.ge.s32.totalorder %s25, 4
    %s33 = sphi 0, %s33
    %s35 = sphi 0, %s33
    %s36 = sphi 0, %s35
    %s50 = sphi 0, %s36
    %s54 = sphi 0, %s54
    %s56 = sphi 0, %s54
    %s57 = sphi 0, %s56
    %s71 = sphi 0, %s57
    %s77 = sphi 0, %s79
    %s80 = sphi 0, %s77
    %s81 = sphi 0, %s80
    %s97 = sphi 0, %s81
  $region4: #{sgns_forward.1} parent=0 // loop_header_branch
    %28 = sbr.rel (%p26) target = $region8
  $region5: #{sgns_forward.1} parent=0 // loop_body
    %s30 = ssub.s32 %s25, 1
    %s31 = ssub.s32 %s25, 2
    %s32 = sadd.s32 %s25, 1
    %s34 = sadd.s32 %s33, 1
    %p37 = scmp.eq.s32.totalorder %s25, 1
    %p38 = scmp.ne.s32.totalorder %s33, %s35
    %p39 = scmp.eq.s32.totalorder %s25, 0
    %p40 = por %p38, %p39
    %p41 = scmp.ne.s32.totalorder %s33, %s35
    %p42 = scmp.eq.s32.totalorder %s30, 1
    %p43 = por %p41, %p42
    %p44 = scmp.ne.s32.totalorder %s35, %s36
    %p45 = scmp.eq.s32.totalorder %s30, 0
    %p46 = por %p44, %p45
    %p47 = scmp.ne.s32.totalorder %s35, %s36
    %p48 = scmp.eq.s32.totalorder %s31, 1
    %p49 = por %p47, %p48
    %p51 = scmp.ne.s32.totalorder %s36, %s50
    %p52 = scmp.eq.s32.totalorder %s31, 0
    %p53 = por %p51, %p52
    %s55 = sadd.s32 %s54, 1
    %p58 = scmp.eq.s32.totalorder %s25, 1
    %p59 = scmp.ne.s32.totalorder %s54, %s56
    %p60 = scmp.eq.s32.totalorder %s25, 0
    %p61 = por %p59, %p60
    %p62 = scmp.ne.s32.totalorder %s54, %s56
    %p63 = scmp.eq.s32.totalorder %s30, 1
    %p64 = por %p62, %p63
    %p65 = scmp.ne.s32.totalorder %s56, %s57
    %p66 = scmp.eq.s32.totalorder %s30, 0
    %p67 = por %p65, %p66
    %p68 = scmp.ne.s32.totalorder %s56, %s57
    %p69 = scmp.eq.s32.totalorder %s31, 1
    %p70 = por %p68, %p69
    %p72 = scmp.ne.s32.totalorder %s57, %s71
    %p73 = scmp.eq.s32.totalorder %s31, 0
    %p74 = por %p72, %p73
    %s75 = ssub.s32 %s25, %s32
    %p76 = scmp.eq.s32.totalorder %s75, 0
    %s78 = sadd.s32 %s77, 1
    %s79 = scalar_select %p76, %s77, %s78
    %p82 = pneg %p76
    %p83 = scmp.eq.s32.totalorder %s25, 1
    %p84 = por %p82, %p83
    %p85 = scmp.ne.s32.totalorder %s77, %s80
    %p86 = scmp.eq.s32.totalorder %s25, 0
    %p87 = por %p85, %p86
    %p88 = scmp.ne.s32.totalorder %s77, %s80
    %p89 = scmp.eq.s32.totalorder %s30, 1
    %p90 = por %p88, %p89
    %p91 = scmp.ne.s32.totalorder %s80, %s81
    %p92 = scmp.eq.s32.totalorder %s30, 0
    %p93 = por %p91, %p92
    %p94 = scmp.ne.s32.totalorder %s80, %s81
    %p95 = scmp.eq.s32.totalorder %s31, 1
    %p96 = por %p94, %p95
    %p98 = scmp.ne.s32.totalorder %s81, %s97
    %p99 = scmp.eq.s32.totalorder %s31, 0
    %p100 = por %p98, %p99
    %p101 = scmp.le.s32.totalorder 1, %s25
    %p102 = scmp.lt.s32.totalorder %s25, 3
    %p103 = pnand %p101, %p102
    %p104 = pneg %p103
    // Predicated region
    $region9: #{sgns_forward.1} parent=5 // pred_check
      _
    $region10: #{sgns_forward.1} parent=5 // pred_check_branch
      %106 = sbr.rel (%p103) target = $region12
    $region11: #{sgns_forward.1} parent=5 // pred_region
      %s107 = ssub.s32 %s25, 1
      // Predicated region
      $region13: #{sgns_forward.1} parent=11 // pred_check
        %p108 = pneg %p46
      $region14: #{sgns_forward.1} parent=11 // pred_check_branch
        %110 = sbr.rel (%p108) target = $region16
      $region15: #{sgns_forward.1} parent=11 // pred_region
        _
      $region16: #{sgns_forward.1} parent=11 // pred_fallthru
        _
      // Predicated region
      $region17: #{sgns_forward.1} parent=11 // pred_check
        %p111 = pneg %p67
      $region18: #{sgns_forward.1} parent=11 // pred_check_branch
        %113 = sbr.rel (%p111) target = $region20
      $region19: #{sgns_forward.1} parent=11 // pred_region
        _
      $region20: #{sgns_forward.1} parent=11 // pred_fallthru
        _
    $region12: #{sgns_forward.1} parent=5 // pred_fallthru
      _
    %p114 = scmp.lt.s32.totalorder %s25, 2
    // Predicated region
    $region21: #{sgns_forward.1} parent=5 // pred_check
      %p115 = pneg %p114
    $region22: #{sgns_forward.1} parent=5 // pred_check_branch
      %117 = sbr.rel (%p115) target = $region24
    $region23: #{sgns_forward.1} parent=5 // pred_region
      _
    $region24: #{sgns_forward.1} parent=5 // pred_fallthru
      _
    %p118 = scmp.le.s32.totalorder 1, %s25
    %p119 = scmp.lt.s32.totalorder %s25, 3
    %p120 = pnand %p118, %p119
    %p121 = pneg %p120
    // Predicated region
    $region25: #{sgns_forward.1} parent=5 // pred_check
      _
    $region26: #{sgns_forward.1} parent=5 // pred_check_branch
      %123 = sbr.rel (%p120) target = $region28
    $region27: #{sgns_forward.1} parent=5 // pred_region
      %s124 = ssub.s32 %s25, 1
      %p125 = pneg %p46
      %p126 = pneg %p43
      %p127 = pneg %p67
      %p128 = pneg %p64
      %p129 = pneg %p93
      %p130 = pneg %p90
      %p131 = scmp.lt.s32.totalorder %s30, 1
      %s132 = scalar_select %p131, %s30, 1
      %s133 = smul.addr %s132, 8
      %s134 = scalar_lea.vmem %s5, %s133
      %p135 = scmp.lt.s32.totalorder %s30, 1
      %s136 = scalar_select %p135, %s30, 1
      %s137 = smul.addr %s136, 8
      %s138 = scalar_lea.vmem %s5, %s137
      %s139 = smul.u32 %s30, 8
      loop: start=0, step=1, limit=8
      $region29: #{sgns_forward.1} parent=27 // loop_pre_header
        _
      $region30: #{sgns_forward.1} parent=27 // loop_header
        %s141 = sphi 0, %s145
        %p142 = scmp.ge.s32.totalorder %s141, 8
      $region31: #{sgns_forward.1} parent=27 // loop_header_branch
        %144 = sbr.rel (%p142) target = $region35
      $region32: #{sgns_forward.1} parent=27 // loop_body
        %s146 = sadd.s32 %s139, %s141
        %s147 = sld [smem:[#allocation5 + %s146]]
        %s148 = scalar_lea.vmem %s3, %s147
        %v149 = vld [vmem:[%s148] sm:$0x1]
        %s150 = scalar_lea.vmem [#allocation2], %s141
        %vm151 = vcmask 253952
        %152 = vst.msk [vmem:[%s150] sm:$0x1] %vm151, %v149
        %s153 = smul.u32 %s141, 8
        %s154 = sld [smem:[#allocation6 + %s146]]
        %s155 = scalar_lea.vmem %s4, %s154
        %v156 = vld [vmem:[%s155] sm:$0x1]
        %s157 = scalar_lea.vmem [#allocation3], %s153
        %158 = vst.msk [vmem:[%s157] sm:$0x1] %vm151, %v156
        %s159 = smul.u32 %s146, 7
        %s160 = sld [smem:[#allocation7 + %s159]]
        %s161 = scalar_lea.vmem %s4, %s160
        %v162 = vld [vmem:[%s161] sm:$0x1]
        %s163 = sadd.s32 %s153, 1
        %s164 = scalar_lea.vmem [#allocation3], %s163
        %165 = vst.msk [vmem:[%s164] sm:$0x1] %vm151, %v162
        %s166 = sadd.s32 %s159, 1
        %s167 = sld [smem:[#allocation7 + %s166]]
        %s168 = scalar_lea.vmem %s4, %s167
        %v169 = vld [vmem:[%s168] sm:$0x1]
        %s170 = sadd.s32 %s153, 2
        %s171 = scalar_lea.vmem [#allocation3], %s170
        %172 = vst.msk [vmem:[%s171] sm:$0x1] %vm151, %v169
        %s173 = sadd.s32 %s159, 2
        %s174 = sld [smem:[#allocation7 + %s173]]
        %s175 = scalar_lea.vmem %s4, %s174
        %v176 = vld [vmem:[%s175] sm:$0x1]
        %s177 = sadd.s32 %s153, 3
        %s178 = scalar_lea.vmem [#allocation3], %s177
        %179 = vst.msk [vmem:[%s178] sm:$0x1] %vm151, %v176
        %s180 = sadd.s32 %s159, 3
        %s181 = sld [smem:[#allocation7 + %s180]]
        %s182 = scalar_lea.vmem %s4, %s181
        %v183 = vld [vmem:[%s182] sm:$0x1]
        %s184 = sadd.s32 %s153, 4
        %s185 = scalar_lea.vmem [#allocation3], %s184
        %186 = vst.msk [vmem:[%s185] sm:$0x1] %vm151, %v183
        %s187 = sadd.s32 %s159, 4
        %s188 = sld [smem:[#allocation7 + %s187]]
        %s189 = scalar_lea.vmem %s4, %s188
        %v190 = vld [vmem:[%s189] sm:$0x1]
        %s191 = sadd.s32 %s153, 5
        %s192 = scalar_lea.vmem [#allocation3], %s191
        %193 = vst.msk [vmem:[%s192] sm:$0x1] %vm151, %v190
        %s194 = sadd.s32 %s159, 5
        %s195 = sld [smem:[#allocation7 + %s194]]
        %s196 = scalar_lea.vmem %s4, %s195
        %v197 = vld [vmem:[%s196] sm:$0x1]
        %s198 = sadd.s32 %s153, 6
        %s199 = scalar_lea.vmem [#allocation3], %s198
        %200 = vst.msk [vmem:[%s199] sm:$0x1] %vm151, %v197
        %s201 = sadd.s32 %s159, 6
        %s202 = sld [smem:[#allocation7 + %s201]]
        %s203 = scalar_lea.vmem %s4, %s202
        %v204 = vld [vmem:[%s203] sm:$0x1]
        %s205 = sadd.s32 %s153, 7
        %s206 = scalar_lea.vmem [#allocation3], %s205
        %207 = vst.msk [vmem:[%s206] sm:$0x1] %vm151, %v204
      $region33: #{sgns_forward.1} parent=27 // loop_footer
        %s145 = sadd.s32 1, %s141
      $region34: #{sgns_forward.1} parent=27 // loop_footer_branch
        %140 = sbr.rel target = $region30
      $region35: #{sgns_forward.1} parent=27 // loop_exit
        _
      %v208 = vld [vmem:[#allocation2] sm:$0xff]
      %v209 = vld [vmem:[#allocation3] sm:$0xff]
      %v210 = vld [vmem:[#allocation3 + $0x8] sm:$0xff]
      %v211 = vld [vmem:[#allocation3 + $0x10] sm:$0xff]
      %v212 = vld [vmem:[#allocation3 + $0x18] sm:$0xff]
      %v213 = vld [vmem:[#allocation3 + $0x20] sm:$0xff]
      %v214 = vld [vmem:[#allocation3 + $0x28] sm:$0xff]
      %v215 = vld [vmem:[#allocation3 + $0x30] sm:$0xff]
      %v216 = vld [vmem:[#allocation3 + $0x38] sm:$0xff]
      %v218 = vcombine.high %v208, %v208
      %v220 = vunpack.c.l.s4 1966171168
      %v221 = vunpack.c.0.s8 %v220
      %v222 = vlaneseq
      %v223 = vshrl.u32 %v222, 7
      %v224 = vsub.s32 %v221, %v223
      %v225 = vrot.slane %v208, %v224
      %v227 = vunpack.c.l.s4 1966171168
      %v228 = vunpack.c.0.s8 %v227
      %v229 = vlaneseq
      %v230 = vshrl.u32 %v229, 7
      %v231 = vsub.s32 %v228, %v230
      %v232 = vrot.slane %v218, %v231
      %v233 = vcombine.high %v225, %v225
      %v234 = vcombine.high %v232, %v232
      %v236 = vunpack.c.l.s4 1966171168
      %v237 = vunpack.c.0.s8 %v236
      %v238 = vlaneseq
      %v239 = vshrl.u32 %v238, 7
      %v240 = vsub.s32 %v237, %v239
      %v241 = vrot.slane %v225, %v240
      %v243 = vunpack.c.l.s4 1966171168
      %v244 = vunpack.c.0.s8 %v243
      %v245 = vlaneseq
      %v246 = vshrl.u32 %v245, 7
      %v247 = vsub.s32 %v244, %v246
      %v248 = vrot.slane %v232, %v247
      %v250 = vunpack.c.l.s4 1966171168
      %v251 = vunpack.c.0.s8 %v250
      %v252 = vlaneseq
      %v253 = vshrl.u32 %v252, 7
      %v254 = vsub.s32 %v251, %v253
      %v255 = vrot.slane %v233, %v254
      %v257 = vunpack.c.l.s4 1966171168
      %v258 = vunpack.c.0.s8 %v257
      %v259 = vlaneseq
      %v260 = vshrl.u32 %v259, 7
      %v261 = vsub.s32 %v258, %v260
      %v262 = vrot.slane %v234, %v261
      %v263 = vcombine.high %v241, %v241
      %v264 = vcombine.high %v248, %v248
      %v265 = vcombine.high %v255, %v255
      %v266 = vcombine.high %v262, %v262
      %v267 = vlaneseq
      %v268 = vshrl.u32 %v267, 7
      %v269 = vsub.s32 0, %v268
      %v270 = vrot.slane %v241, %v269
      %v271 = vlaneseq
      %v272 = vshrl.u32 %v271, 7
      %v273 = vsub.s32 0, %v272
      %v274 = vrot.slane %v255, %v273
      %v275 = vlaneseq
      %v276 = vshrl.u32 %v275, 7
      %v277 = vsub.s32 0, %v276
      %v278 = vrot.slane %v263, %v277
      %v279 = vlaneseq
      %v280 = vshrl.u32 %v279, 7
      %v281 = vsub.s32 0, %v280
      %v282 = vrot.slane %v265, %v281
      %v283 = vlaneseq
      %v284 = vshrl.u32 %v283, 7
      %v285 = vsub.s32 0, %v284
      %v286 = vrot.slane %v248, %v285
      %v287 = vlaneseq
      %v288 = vshrl.u32 %v287, 7
      %v289 = vsub.s32 0, %v288
      %v290 = vrot.slane %v262, %v289
      %v291 = vlaneseq
      %v292 = vshrl.u32 %v291, 7
      %v293 = vsub.s32 0, %v292
      %v294 = vrot.slane %v264, %v293
      %v295 = vlaneseq
      %v296 = vshrl.u32 %v295, 7
      %v297 = vsub.s32 0, %v296
      %v298 = vrot.slane %v266, %v297
      %v307 = vmul.f32 %v209, %v270
      %v308 = vmul.f32 %v210, %v274
      %v309 = vmul.f32 %v211, %v278
      %v310 = vmul.f32 %v212, %v282
      %v311 = vmul.f32 %v213, %v286
      %v312 = vmul.f32 %v214, %v290
      %v313 = vmul.f32 %v215, %v294
      %v314 = vmul.f32 %v216, %v298
      %vm315 = vcmask 261120
      %v316 = vsel %vm315, %v307, 0.0
      %317 = vadd.xlane.f32.xlu0 %v316
      %v318 = vpop.xlane.xlu0 %317
      %v319 = vsel %vm315, %v308, 0.0
      %320 = vadd.xlane.f32.xlu0 %v319
      %v321 = vpop.xlane.xlu0 %320
      %v322 = vsel %vm315, %v309, 0.0
      %323 = vadd.xlane.f32.xlu0 %v322
      %v324 = vpop.xlane.xlu0 %323
      %v325 = vsel %vm315, %v310, 0.0
      %326 = vadd.xlane.f32.xlu0 %v325
      %v327 = vpop.xlane.xlu0 %326
      %v328 = vsel %vm315, %v311, 0.0
      %329 = vadd.xlane.f32.xlu0 %v328
      %v330 = vpop.xlane.xlu0 %329
      %v331 = vsel %vm315, %v312, 0.0
      %332 = vadd.xlane.f32.xlu0 %v331
      %v333 = vpop.xlane.xlu0 %332
      %v334 = vsel %vm315, %v313, 0.0
      %335 = vadd.xlane.f32.xlu0 %v334
      %v336 = vpop.xlane.xlu0 %335
      %v337 = vsel %vm315, %v314, 0.0
      %338 = vadd.xlane.f32.xlu0 %v337
      %v339 = vpop.xlane.xlu0 %338
      %v340 = vlaneseq
      %v341 = vand.u32 %v340, 127
      %vm342 = vcmp.eq.s32.totalorder %v341, 0
      %v343 = vsel %vm342, 1.0, -1.0
      %346 = vbcast.lane.b32.xlu0 %v343, 256
      %v347 = vpop.permute.xlu0 %346
      %v349 = vmul.f32 %v318, %v347
      %v350 = vmul.f32 %v321, %v347
      %v351 = vmul.f32 %v324, %v347
      %v352 = vmul.f32 %v327, %v347
      %v353 = vmul.f32 %v330, %v347
      %v354 = vmul.f32 %v333, %v347
      %v355 = vmul.f32 %v336, %v347
      %v356 = vmul.f32 %v339, %v347
      %v357 = vmin.f32 %v349, 0.0
      %v358 = vmin.f32 %v350, 0.0
      %v359 = vmin.f32 %v351, 0.0
      %v360 = vmin.f32 %v352, 0.0
      %v361 = vmin.f32 %v353, 0.0
      %v362 = vmin.f32 %v354, 0.0
      %v363 = vmin.f32 %v355, 0.0
      %v364 = vmin.f32 %v356, 0.0
      %v365 = vand.u32 2147483647, %v349
      %v366 = vand.u32 2147483647, %v350
      %v367 = vand.u32 2147483647, %v351
      %v368 = vand.u32 2147483647, %v352
      %v369 = vand.u32 2147483647, %v353
      %v370 = vand.u32 2147483647, %v354
      %v371 = vand.u32 2147483647, %v355
      %v372 = vand.u32 2147483647, %v356
      %v373 = vsub.f32 0.0, %v365
      %v374 = vsub.f32 0.0, %v366
      %v375 = vsub.f32 0.0, %v367
      %v376 = vsub.f32 0.0, %v368
      %v377 = vsub.f32 0.0, %v369
      %v378 = vsub.f32 0.0, %v370
      %v379 = vsub.f32 0.0, %v371
      %v380 = vsub.f32 0.0, %v372
      %v381 = vmul.f32 %v373, 1.442695
      %v382 = vpow.pop %v381
      %v383 = vmul.f32 %v374, 1.442695
      %v384 = vpow.pop %v383
      %v385 = vmul.f32 %v375, 1.442695
      %v386 = vpow.pop %v385
      %v387 = vmul.f32 %v376, 1.442695
      %v388 = vpow.pop %v387
      %v389 = vmul.f32 %v377, 1.442695
      %v390 = vpow.pop %v389
      %v391 = vmul.f32 %v378, 1.442695
      %v392 = vpow.pop %v391
      %v393 = vmul.f32 %v379, 1.442695
      %v394 = vpow.pop %v393
      %v395 = vmul.f32 %v380, 1.442695
      %v396 = vpow.pop %v395
      %v397 = vadd.f32 %v382, 1.0
      %v398 = vlog2.pop %v397
      %v399 = vmul.f32 %v398, 0.6931472
      %v400 = vmul.f32 -0.5, %v382
      %v401 = vadd.f32 %v400, 1.0
      %v402 = vmul.f32 %v401, %v382
      %v403 = vand.u32 2147483647, %v382
      %vm404 = vcmp.lt.f32.partialorder %v403, 0.0004427343
      %v405 = vsel %vm404, %v402, %v399
      %v406 = vadd.f32 %v384, 1.0
      %v407 = vlog2.pop %v406
      %v408 = vmul.f32 %v407, 0.6931472
      %v409 = vmul.f32 -0.5, %v384
      %v410 = vadd.f32 %v409, 1.0
      %v411 = vmul.f32 %v410, %v384
      %v412 = vand.u32 2147483647, %v384
      %vm413 = vcmp.lt.f32.partialorder %v412, 0.0004427343
      %v414 = vsel %vm413, %v411, %v408
      %v415 = vadd.f32 %v386, 1.0
      %v416 = vlog2.pop %v415
      %v417 = vmul.f32 %v416, 0.6931472
      %v418 = vmul.f32 -0.5, %v386
      %v419 = vadd.f32 %v418, 1.0
      %v420 = vmul.f32 %v419, %v386
      %v421 = vand.u32 2147483647, %v386
      %vm422 = vcmp.lt.f32.partialorder %v421, 0.0004427343
      %v423 = vsel %vm422, %v420, %v417
      %v424 = vadd.f32 %v388, 1.0
      %v425 = vlog2.pop %v424
      %v426 = vmul.f32 %v425, 0.6931472
      %v427 = vmul.f32 -0.5, %v388
      %v428 = vadd.f32 %v427, 1.0
      %v429 = vmul.f32 %v428, %v388
      %v430 = vand.u32 2147483647, %v388
      %vm431 = vcmp.lt.f32.partialorder %v430, 0.0004427343
      %v432 = vsel %vm431, %v429, %v426
      %v433 = vadd.f32 %v390, 1.0
      %v434 = vlog2.pop %v433
      %v435 = vmul.f32 %v434, 0.6931472
      %v436 = vmul.f32 -0.5, %v390
      %v437 = vadd.f32 %v436, 1.0
      %v438 = vmul.f32 %v437, %v390
      %v439 = vand.u32 2147483647, %v390
      %vm440 = vcmp.lt.f32.partialorder %v439, 0.0004427343
      %v441 = vsel %vm440, %v438, %v435
      %v442 = vadd.f32 %v392, 1.0
      %v443 = vlog2.pop %v442
      %v444 = vmul.f32 %v443, 0.6931472
      %v445 = vmul.f32 -0.5, %v392
      %v446 = vadd.f32 %v445, 1.0
      %v447 = vmul.f32 %v446, %v392
      %v448 = vand.u32 2147483647, %v392
      %vm449 = vcmp.lt.f32.partialorder %v448, 0.0004427343
      %v450 = vsel %vm449, %v447, %v444
      %v451 = vadd.f32 %v394, 1.0
      %v452 = vlog2.pop %v451
      %v453 = vmul.f32 %v452, 0.6931472
      %v454 = vmul.f32 -0.5, %v394
      %v455 = vadd.f32 %v454, 1.0
      %v456 = vmul.f32 %v455, %v394
      %v457 = vand.u32 2147483647, %v394
      %vm458 = vcmp.lt.f32.partialorder %v457, 0.0004427343
      %v459 = vsel %vm458, %v456, %v453
      %v460 = vadd.f32 %v396, 1.0
      %v461 = vlog2.pop %v460
      %v462 = vmul.f32 %v461, 0.6931472
      %v463 = vmul.f32 -0.5, %v396
      %v464 = vadd.f32 %v463, 1.0
      %v465 = vmul.f32 %v464, %v396
      %v466 = vand.u32 2147483647, %v396
      %vm467 = vcmp.lt.f32.partialorder %v466, 0.0004427343
      %v468 = vsel %vm467, %v465, %v462
      %v469 = vsub.f32 %v357, %v405
      %v470 = vsub.f32 %v358, %v414
      %v471 = vsub.f32 %v359, %v423
      %v472 = vsub.f32 %v360, %v432
      %v473 = vsub.f32 %v361, %v441
      %v474 = vsub.f32 %v362, %v450
      %v475 = vsub.f32 %v363, %v459
      %v476 = vsub.f32 %v364, %v468
      %v477 = vlaneseq
      %v478 = vshrl.u32 %v477, 7
      %v479 = vstv %s139
      %v480 = vadd.s32 %v479, %v478
      %vm481 = vcmp.lt.s32.totalorder %v480, 10
      %v482 = vsel %vm481, 1, 0
      %vm483 = vcmp.eq.s32.totalorder %v482, 1
      %492 = vset.pattern.permute.xlu0 0
      %493 = vperm.xlu0 %492, %v469
      %v494 = vpop.permute.xlu0 %493
      %495 = vset.pattern.permute.xlu0 0
      %496 = vperm.xlu0 %495, %v470
      %v497 = vpop.permute.xlu0 %496
      %498 = vset.pattern.permute.xlu0 0
      %499 = vperm.xlu0 %498, %v471
      %v500 = vpop.permute.xlu0 %499
      %501 = vset.pattern.permute.xlu0 0
      %502 = vperm.xlu0 %501, %v472
      %v503 = vpop.permute.xlu0 %502
      %504 = vset.pattern.permute.xlu0 0
      %505 = vperm.xlu0 %504, %v473
      %v506 = vpop.permute.xlu0 %505
      %507 = vset.pattern.permute.xlu0 0
      %508 = vperm.xlu0 %507, %v474
      %v509 = vpop.permute.xlu0 %508
      %510 = vset.pattern.permute.xlu0 0
      %511 = vperm.xlu0 %510, %v475
      %v512 = vpop.permute.xlu0 %511
      %513 = vset.pattern.permute.xlu0 0
      %514 = vperm.xlu0 %513, %v476
      %v515 = vpop.permute.xlu0 %514
      %v516 = vlaneseq
      %v517 = vshrl.u32 %v516, 7
      %v518 = vsub.s32 %v341, %v517
      %v519 = vrot.slane %v494, %v518
      %v520 = vlaneseq
      %v521 = vshrl.u32 %v520, 7
      %v522 = vsub.s32 %v341, %v521
      %v523 = vrot.slane %v497, %v522
      %v524 = vlaneseq
      %v525 = vshrl.u32 %v524, 7
      %v526 = vsub.s32 %v341, %v525
      %v527 = vrot.slane %v500, %v526
      %v528 = vlaneseq
      %v529 = vshrl.u32 %v528, 7
      %v530 = vsub.s32 %v341, %v529
      %v531 = vrot.slane %v503, %v530
      %v532 = vlaneseq
      %v533 = vshrl.u32 %v532, 7
      %v534 = vsub.s32 %v341, %v533
      %v535 = vrot.slane %v506, %v534
      %v536 = vlaneseq
      %v537 = vshrl.u32 %v536, 7
      %v538 = vsub.s32 %v341, %v537
      %v539 = vrot.slane %v509, %v538
      %v540 = vlaneseq
      %v541 = vshrl.u32 %v540, 7
      %v542 = vsub.s32 %v341, %v541
      %v543 = vrot.slane %v512, %v542
      %v544 = vlaneseq
      %v545 = vshrl.u32 %v544, 7
      %v546 = vsub.s32 %v341, %v545
      %v547 = vrot.slane %v515, %v546
      %vm548 = vcmask 1041409
      %v549 = vsel %vm548, %v523, %v519
      %vm550 = vcmask 1042434
      %v551 = vsel %vm550, %v527, %v549
      %vm552 = vcmask 1043459
      %v553 = vsel %vm552, %v531, %v551
      %vm554 = vcmask 1044484
      %v555 = vsel %vm554, %v535, %v553
      %vm556 = vcmask 1045509
      %v557 = vsel %vm556, %v539, %v555
      %vm558 = vcmask 1046534
      %v559 = vsel %vm558, %v543, %v557
      %vm560 = vcmask 1047559
      %v561 = vsel %vm560, %v547, %v559
      %v563 = vsel %vm483, %v561, 0.0
      %vm564 = vcmask 64512
      %v565 = vsel %vm564, %v563, 0.0
      %566 = vadd.xlane.f32.xlu0 %v565
      %v567 = vpop.xlane.xlu0 %566
      %v568 = vrot.slane %v567, 4
      %v569 = vadd.f32 %v567, %v568
      %v570 = vrot.slane %v569, 2
      %v571 = vadd.f32 %v569, %v570
      %v572 = vrot.slane %v571, 1
      %v573 = vadd.f32 %v571, %v572
      %vm574 = vcmp.eq.s32.totalorder %v478, 0
      %vm575 = vmand %vm574, %vm342
      %v576 = vsel %vm575, %v573, 0.0
      %577 = vst [vmem:[%s138] sm:$0xff] %v576
      %p578 = scmp.lt.s32.totalorder %s30, 1
      %s579 = scalar_select %p578, %s30, 1
      %s580 = smul.addr %s579, 8
      %s581 = scalar_lea.vmem %s5, %s580
      // Predicated region
      $region36: #{sgns_forward.1} parent=27 // pred_check
        %p582 = pneg %p90
      $region37: #{sgns_forward.1} parent=27 // pred_check_branch
        %584 = sbr.rel (%p582) target = $region39
      $region38: #{sgns_forward.1} parent=27 // pred_region
        _
      $region39: #{sgns_forward.1} parent=27 // pred_fallthru
        _
    $region28: #{sgns_forward.1} parent=5 // pred_fallthru
      _
    %p585 = scmp.le.s32.totalorder 2, %s25
    // Predicated region
    $region40: #{sgns_forward.1} parent=5 // pred_check
      %p586 = pneg %p585
    $region41: #{sgns_forward.1} parent=5 // pred_check_branch
      %588 = sbr.rel (%p586) target = $region43
    $region42: #{sgns_forward.1} parent=5 // pred_region
      %s589 = ssub.s32 %s25, 2
      // Predicated region
      $region44: #{sgns_forward.1} parent=42 // pred_check
        %p590 = pneg %p96
      $region45: #{sgns_forward.1} parent=42 // pred_check_branch
        %592 = sbr.rel (%p590) target = $region47
      $region46: #{sgns_forward.1} parent=42 // pred_region
        %p593 = scmp.lt.s32.totalorder %s31, 1
        %s594 = scalar_select %p593, %s31, 1
        %s595 = smul.addr %s594, 8
        %s596 = scalar_lea.vmem %s5, %s595
      $region47: #{sgns_forward.1} parent=42 // pred_fallthru
        _
    $region43: #{sgns_forward.1} parent=5 // pred_fallthru
      _
  $region6: #{sgns_forward.1} parent=0 // loop_footer
    %s29 = sadd.s32 1, %s25
  $region7: #{sgns_forward.1} parent=0 // loop_footer_branch
    %24 = sbr.rel target = $region3
  $region8: #{sgns_forward.1} parent=0 // loop_exit
    _

</llo_original>
